<compile_context>
chip_gen: v5e
topology: v5e:2x2
jax: 0.10.0
libtpu: 0.0.40
codegen_flags: <defaults>
</compile_context>

<pallas_src>
import functools

import jax
import jax.numpy as jnp
from jax.experimental import pallas as pl
from jax.experimental.pallas import tpu as pltpu

HIDDEN = 256  # fixed by the module definition


def _round_up(v, m):
    return ((v + m - 1) // m) * m


def _g_mlp_kernel(x_ref, c_ref, w1_ref, csum_ref, b1_ref, w2_ref, b2_ref,
                  w3_ref, b3_ref, o_ref, h2_ref):
    """Fused 3-layer MLP tile: (ReLU o Linear) x2 then Tanh o Linear.

    x_ref   : (tb, z_pad)   bf16 batch tile (zero-padded latent dim)
    c_ref   : (tb, 1)       f32 condition scalar per row
    w1_ref  : (z_pad, 256)  bf16   csum_ref: (1,256) f32 = colsum(W1[z:,:])
    w2_ref  : (256, 256)    bf16
    w3_ref  : (256, tn)     bf16 output-feature tile
    b*_ref  : (1, feat)     f32
    o_ref   : (tb, tn)      f32
    h2_ref  : (tb, 256)     bf16 scratch; hidden activations, computed at j==0
    """
    # Layers 1+2 only once per batch tile (feature axis j is the inner grid
    # axis, marked "arbitrary"); result cached in VMEM scratch for all j.
    @pl.when(pl.program_id(1) == 0)
    def _():
        # Layer 1: [x, c·1] @ W1 == x @ W1_top + c * colsum(W1_bottom)
        h1 = jnp.dot(x_ref[...], w1_ref[...],
                     preferred_element_type=jnp.float32)
        h1 = jnp.maximum(h1 + c_ref[...] * csum_ref[...] + b1_ref[...], 0.0)
        # Layer 2
        h2 = jnp.dot(h1.astype(jnp.bfloat16), w2_ref[...],
                     preferred_element_type=jnp.float32) + b2_ref[...]
        h2_ref[...] = jnp.maximum(h2, 0.0).astype(jnp.bfloat16)

    # Layer 3 (+ Tanh), tiled over output features
    h3 = jnp.dot(h2_ref[...], w3_ref[...],
                 preferred_element_type=jnp.float32) + b3_ref[...]
    o_ref[...] = jnp.tanh(h3)


@functools.partial(jax.jit, static_argnames=("img_size", "batch_tile"))
def conditional_g_forward(x, c, params, *, img_size, batch_tile=256):
    """Pallas-backed forward pass of conditional_G.

    x: (B, z_dim) float32, c: (B,) float32
    returns: (B, 1, img_size, img_size) float32
    """
    w1, b1, w2, b2, w3, b3 = params
    B, z_dim = x.shape
    out_feat = img_size * img_size

    # ---- batch (M) tiling: big MXU-friendly tiles, >=2 steps when possible ----
    nb_min = 2 if B > 8 else 1                    # >=2 batch steps -> 2 TCs (v7x)
    nb = max(nb_min, -(-B // batch_tile))
    tb = _round_up(-(-B // nb), 8)
    B_pad = _round_up(B, tb)
    nb = B_pad // tb

    # ---- latent (K) padding: lane-dense x loads, zero rows are free ----
    z_pad = _round_up(z_dim, 128)

    # ---- output-feature (N) tiling: lane-dense, VMEM-bounded W3 / out tiles ----
    tn = min(2048, _round_up(out_feat, 128))
    out_pad = _round_up(out_feat, tn)
    nn = out_pad // tn

    # ---- fold the broadcast condition through layer 1 (no host-side concat) ----
    w1_top = jnp.zeros((z_pad, HIDDEN), jnp.bfloat16)
    w1_top = w1_top.at[:z_dim].set(w1[:z_dim].astype(jnp.bfloat16))     # (z_pad,256)
    w1_csum = jnp.sum(w1[z_dim:], axis=0, keepdims=True).astype(jnp.float32)

    w2_b = w2.astype(jnp.bfloat16)
    b1r = b1.reshape(1, HIDDEN).astype(jnp.float32)
    b2r = b2.reshape(1, HIDDEN).astype(jnp.float32)

    # pad layer-3 weights/bias columns to the lane-dense N tiling (zeros)
    w3_p = jnp.zeros((HIDDEN, out_pad), jnp.bfloat16)
    w3_p = w3_p.at[:, :out_feat].set(w3.astype(jnp.bfloat16))
    b3_p = jnp.zeros((1, out_pad), jnp.float32)
    b3_p = b3_p.at[:, :out_feat].set(b3.reshape(1, out_feat).astype(jnp.float32))

    # pad batch + latent; bf16 activations halve the input DMA
    x_p = jnp.zeros((B_pad, z_pad), jnp.bfloat16)
    x_p = x_p.at[:B, :z_dim].set(x.astype(jnp.bfloat16))
    c_p = jnp.zeros((B_pad, 1), jnp.float32).at[:B, 0].set(c.astype(jnp.float32))

    const = lambda i, j: (0, 0)  # resident weights: same (full) block every step

    out2d = pl.pallas_call(
        _g_mlp_kernel,
        out_shape=jax.ShapeDtypeStruct((B_pad, out_pad), jnp.float32),
        grid_spec=pltpu.PrefetchScalarGridSpec(
            num_scalar_prefetch=0,
            grid=(nb, nn),
            in_specs=[
                pl.BlockSpec((tb, z_pad), lambda i, j: (i, 0)),     # x tile (bf16)
                pl.BlockSpec((tb, 1), lambda i, j: (i, 0)),         # c (f32)
                pl.BlockSpec((z_pad, HIDDEN), const),               # W1_top (bf16)
                pl.BlockSpec((1, HIDDEN), const),                   # colsum(W1_bot)
                pl.BlockSpec((1, HIDDEN), const),                   # b1
                pl.BlockSpec((HIDDEN, HIDDEN), const),              # W2 (bf16)
                pl.BlockSpec((1, HIDDEN), const),                   # b2
                pl.BlockSpec((HIDDEN, tn), lambda i, j: (0, j)),    # W3 N-tile (bf16)
                pl.BlockSpec((1, tn), lambda i, j: (0, j)),         # b3 N-tile
            ],
            out_specs=pl.BlockSpec((tb, tn), lambda i, j: (i, j)),
            scratch_shapes=[pltpu.VMEM((tb, HIDDEN), jnp.bfloat16)],  # cached h2
        ),
        compiler_params=pltpu.CompilerParams(
            # j (output-feature) axis reuses the h2 scratch -> "arbitrary"
            dimension_semantics=("parallel", "arbitrary"),
            vmem_limit_bytes=32 * 1024 * 1024,
        ),
    )(x_p, c_p, w1_top, w1_csum, b1r, w2_b, b2r, w3_p, b3_p)

    # ---- glue: drop padding, view(B, 1, img, img) ----
    out2d = out2d[:B, :out_feat]
    return out2d.reshape(B, 1, img_size, img_size)


def init_params(key, z_dim, img_size):
    """Deterministic parameter init (PyTorch Linear-style uniform bounds)."""
    in_feat = 2 * z_dim
    out_feat = img_size * img_size
    shapes = [
        ((in_feat, HIDDEN), (HIDDEN,)),
        ((HIDDEN, HIDDEN), (HIDDEN,)),
        ((HIDDEN, out_feat), (out_feat,)),
    ]
    params = []
    for (ws, bs) in shapes:
        key, kw, kb = jax.random.split(key, 3)
        bound = 1.0 / jnp.sqrt(ws[0])
        w = jax.random.uniform(kw, ws, jnp.float32, -bound, bound)
        b = jax.random.uniform(kb, bs, jnp.float32, -bound, bound)
        params += [w, b]
    return tuple(params)


def _reference_forward(x, c, params, img_size):
    """Pure-JAX f32 reference (matches the PyTorch module exactly)."""
    w1, b1, w2, b2, w3, b3 = params
    B, z_dim = x.shape
    c_exp = jnp.broadcast_to(c[:, None], (B, z_dim))
    h = jnp.concatenate([x, c_exp], axis=1)
    h = jnp.maximum(h @ w1 + b1, 0.0)
    h = jnp.maximum(h @ w2 + b2, 0.0)
    h = jnp.tanh(h @ w3 + b3)
    return h.reshape(B, 1, img_size, img_size)


if __name__ == "__main__":
    # small shapes consistent with the module; B and img chosen so that the
    # batch/output padding + slicing path is exercised.
    B, Z, IMG = 10, 32, 12

    key = jax.random.PRNGKey(0)
    kx, kc, kp = jax.random.split(key, 3)
    x = jax.random.normal(kx, (B, Z), jnp.float32)
    c = jax.random.uniform(kc, (B,), jnp.float32)  # condition scalar per sample
    params = init_params(kp, Z, IMG)

    out = conditional_g_forward(x, c, params, img_size=IMG)
    out = jax.block_until_ready(out)

    ref = _reference_forward(x, c, params, IMG)
    assert out.shape == (B, 1, IMG, IMG)
    # bf16 MXU operands (f32 accumulation) -> small drift vs the f32 reference
    assert jnp.allclose(out, ref, atol=3e-2, rtol=3e-2), (
        float(jnp.max(jnp.abs(out - ref))))

    print("KERNEL_OK")
</pallas_src>

<mosaic_0001>
module attributes {stable_mosaic.version = 11 : i64} {
  func.func @_g_mlp_kernel(%arg0: i32, %arg1: i32, %arg2: memref<8x128xbf16, #tpu.memory_space<vmem>>, %arg3: memref<8x1xf32, #tpu.memory_space<vmem>>, %arg4: memref<128x256xbf16, #tpu.memory_space<vmem>>, %arg5: memref<1x256xf32, #tpu.memory_space<vmem>>, %arg6: memref<1x256xf32, #tpu.memory_space<vmem>>, %arg7: memref<256x256xbf16, #tpu.memory_space<vmem>>, %arg8: memref<1x256xf32, #tpu.memory_space<vmem>>, %arg9: memref<256x256xbf16, #tpu.memory_space<vmem>>, %arg10: memref<1x256xf32, #tpu.memory_space<vmem>>, %arg11: memref<8x256xf32, #tpu.memory_space<vmem>>, %arg12: memref<8x256xbf16, #tpu.memory_space<vmem>>) attributes {dimension_semantics = [#tpu.dimension_semantics<parallel>, #tpu.dimension_semantics<arbitrary>], iteration_bounds = array<i64: 2, 1>, scalar_prefetch = 0 : i64, scratch_operands = 1 : i64, tpu.core_type = #tpu.core_type<tc>, window_params = [{transform_indices = @transform_0, window_bounds = array<i64: 8, 128>}, {transform_indices = @transform_1, window_bounds = array<i64: 8, 1>}, {pipeline_mode = #tpu.pipeline_mode<synchronous>, transform_indices = @transform_2, window_bounds = array<i64: 128, 256>}, {pipeline_mode = #tpu.pipeline_mode<synchronous>, transform_indices = @transform_3, window_bounds = array<i64: 1, 256>}, {pipeline_mode = #tpu.pipeline_mode<synchronous>, transform_indices = @transform_4, window_bounds = array<i64: 1, 256>}, {pipeline_mode = #tpu.pipeline_mode<synchronous>, transform_indices = @transform_5, window_bounds = array<i64: 256, 256>}, {pipeline_mode = #tpu.pipeline_mode<synchronous>, transform_indices = @transform_6, window_bounds = array<i64: 1, 256>}, {transform_indices = @transform_7, window_bounds = array<i64: 256, 256>}, {transform_indices = @transform_8, window_bounds = array<i64: 1, 256>}, {transform_indices = @transform_9, window_bounds = array<i64: 8, 256>}]} {
    %c0_i32 = arith.constant 0 : i32
    %0 = arith.cmpi eq, %arg1, %c0_i32 : i32
    %1 = arith.extui %0 : i1 to i32
    %c0_i32_0 = arith.constant 0 : i32
    %2 = arith.cmpi ne, %1, %c0_i32_0 : i32
    scf.if %2 {
      %c0_8 = arith.constant 0 : index
      %c0_9 = arith.constant 0 : index
      %11 = vector.load %arg2[%c0_8, %c0_9] : memref<8x128xbf16, #tpu.memory_space<vmem>>, vector<8x128xbf16>
      %c0_10 = arith.constant 0 : index
      %c0_11 = arith.constant 0 : index
      %12 = vector.load %arg4[%c0_10, %c0_11] : memref<128x256xbf16, #tpu.memory_space<vmem>>, vector<128x256xbf16>
      %cst_12 = arith.constant dense<0.000000e+00> : vector<8x256xf32>
      %13 = tpu.matmul %11, %12, %cst_12 {dimension_numbers = #tpu.dot_dimension_numbers<[1], [0], [0], [1], [0, 0, 1, 1], [], []>} : vector<8x128xbf16>, vector<128x256xbf16>, vector<8x256xf32> -> vector<8x256xf32>
      %c0_13 = arith.constant 0 : index
      %c0_14 = arith.constant 0 : index
      %14 = vector.load %arg3[%c0_13, %c0_14] : memref<8x1xf32, #tpu.memory_space<vmem>>, vector<8x1xf32>
      %c0_15 = arith.constant 0 : index
      %c0_16 = arith.constant 0 : index
      %15 = vector.load %arg5[%c0_15, %c0_16] : memref<1x256xf32, #tpu.memory_space<vmem>>, vector<1x256xf32>
      %16 = vector.broadcast %14 : vector<8x1xf32> to vector<8x256xf32>
      %17 = vector.broadcast %15 : vector<1x256xf32> to vector<8x256xf32>
      %18 = arith.mulf %16, %17 : vector<8x256xf32>
      %19 = arith.addf %13, %18 : vector<8x256xf32>
      %c0_17 = arith.constant 0 : index
      %c0_18 = arith.constant 0 : index
      %20 = vector.load %arg6[%c0_17, %c0_18] : memref<1x256xf32, #tpu.memory_space<vmem>>, vector<1x256xf32>
      %21 = vector.broadcast %20 : vector<1x256xf32> to vector<8x256xf32>
      %22 = arith.addf %19, %21 : vector<8x256xf32>
      %cst_19 = arith.constant 0.000000e+00 : f32
      %23 = vector.broadcast %cst_19 : f32 to vector<8x256xf32>
      %24 = arith.maximumf %22, %23 : vector<8x256xf32>
      %25 = arith.truncf %24 : vector<8x256xf32> to vector<8x256xbf16>
      %c0_20 = arith.constant 0 : index
      %c0_21 = arith.constant 0 : index
      %26 = vector.load %arg7[%c0_20, %c0_21] : memref<256x256xbf16, #tpu.memory_space<vmem>>, vector<256x256xbf16>
      %cst_22 = arith.constant dense<0.000000e+00> : vector<8x256xf32>
      %27 = tpu.matmul %25, %26, %cst_22 {dimension_numbers = #tpu.dot_dimension_numbers<[1], [0], [0], [1], [0, 0, 1, 1], [], []>} : vector<8x256xbf16>, vector<256x256xbf16>, vector<8x256xf32> -> vector<8x256xf32>
      %c0_23 = arith.constant 0 : index
      %c0_24 = arith.constant 0 : index
      %28 = vector.load %arg8[%c0_23, %c0_24] : memref<1x256xf32, #tpu.memory_space<vmem>>, vector<1x256xf32>
      %29 = vector.broadcast %28 : vector<1x256xf32> to vector<8x256xf32>
      %30 = arith.addf %27, %29 : vector<8x256xf32>
      %cst_25 = arith.constant 0.000000e+00 : f32
      %31 = vector.broadcast %cst_25 : f32 to vector<8x256xf32>
      %32 = arith.maximumf %30, %31 : vector<8x256xf32>
      %33 = arith.truncf %32 : vector<8x256xf32> to vector<8x256xbf16>
      %c0_26 = arith.constant 0 : index
      %c0_27 = arith.constant 0 : index
      %34 = vector.load %arg12[%c0_26, %c0_27] : memref<8x256xbf16, #tpu.memory_space<vmem>>, vector<8x256xbf16>
      tpu.vector_store %arg12[%c0_26, %c0_27], %33 {strides = array<i32>} : memref<8x256xbf16, #tpu.memory_space<vmem>>, vector<8x256xbf16>,
    } else {
    }
    %c0 = arith.constant 0 : index
    %c0_1 = arith.constant 0 : index
    %3 = vector.load %arg12[%c0, %c0_1] : memref<8x256xbf16, #tpu.memory_space<vmem>>, vector<8x256xbf16>
    %c0_2 = arith.constant 0 : index
    %c0_3 = arith.constant 0 : index
    %4 = vector.load %arg9[%c0_2, %c0_3] : memref<256x256xbf16, #tpu.memory_space<vmem>>, vector<256x256xbf16>
    %cst = arith.constant dense<0.000000e+00> : vector<8x256xf32>
    %5 = tpu.matmul %3, %4, %cst {dimension_numbers = #tpu.dot_dimension_numbers<[1], [0], [0], [1], [0, 0, 1, 1], [], []>} : vector<8x256xbf16>, vector<256x256xbf16>, vector<8x256xf32> -> vector<8x256xf32>
    %c0_4 = arith.constant 0 : index
    %c0_5 = arith.constant 0 : index
    %6 = vector.load %arg10[%c0_4, %c0_5] : memref<1x256xf32, #tpu.memory_space<vmem>>, vector<1x256xf32>
    %7 = vector.broadcast %6 : vector<1x256xf32> to vector<8x256xf32>
    %8 = arith.addf %5, %7 : vector<8x256xf32>
    %9 = math.tanh %8 : vector<8x256xf32>
    %c0_6 = arith.constant 0 : index
    %c0_7 = arith.constant 0 : index
    %10 = vector.load %arg11[%c0_6, %c0_7] : memref<8x256xf32, #tpu.memory_space<vmem>>, vector<8x256xf32>
    tpu.vector_store %arg11[%c0_6, %c0_7], %9 {strides = array<i32>} : memref<8x256xf32, #tpu.memory_space<vmem>>, vector<8x256xf32>,
    return
  }
  func.func @transform_0(%arg0: i32, %arg1: i32) -> (i32, i32) {
    %c0_i32 = arith.constant 0 : i32
    %c0_i32_0 = arith.constant 0 : i32
    return %arg0, %c0_i32 : i32, i32
  }
  func.func @transform_1(%arg0: i32, %arg1: i32) -> (i32, i32) {
    %c0_i32 = arith.constant 0 : i32
    %c0_i32_0 = arith.constant 0 : i32
    return %arg0, %c0_i32 : i32, i32
  }
  func.func @transform_2(%arg0: i32, %arg1: i32) -> (i32, i32) {
    %c0_i32 = arith.constant 0 : i32
    %c0_i32_0 = arith.constant 0 : i32
    %c0_i32_1 = arith.constant 0 : i32
    return %c0_i32, %c0_i32_0 : i32, i32
  }
  func.func @transform_3(%arg0: i32, %arg1: i32) -> (i32, i32) {
    %c0_i32 = arith.constant 0 : i32
    %c0_i32_0 = arith.constant 0 : i32
    %c0_i32_1 = arith.constant 0 : i32
    return %c0_i32, %c0_i32_0 : i32, i32
  }
  func.func @transform_4(%arg0: i32, %arg1: i32) -> (i32, i32) {
    %c0_i32 = arith.constant 0 : i32
    %c0_i32_0 = arith.constant 0 : i32
    %c0_i32_1 = arith.constant 0 : i32
    return %c0_i32, %c0_i32_0 : i32, i32
  }
  func.func @transform_5(%arg0: i32, %arg1: i32) -> (i32, i32) {
    %c0_i32 = arith.constant 0 : i32
    %c0_i32_0 = arith.constant 0 : i32
    %c0_i32_1 = arith.constant 0 : i32
    return %c0_i32, %c0_i32_0 : i32, i32
  }
  func.func @transform_6(%arg0: i32, %arg1: i32) -> (i32, i32) {
    %c0_i32 = arith.constant 0 : i32
    %c0_i32_0 = arith.constant 0 : i32
    %c0_i32_1 = arith.constant 0 : i32
    return %c0_i32, %c0_i32_0 : i32, i32
  }
  func.func @transform_7(%arg0: i32, %arg1: i32) -> (i32, i32) {
    %c0_i32 = arith.constant 0 : i32
    %c0_i32_0 = arith.constant 0 : i32
    return %c0_i32, %arg1 : i32, i32
  }
  func.func @transform_8(%arg0: i32, %arg1: i32) -> (i32, i32) {
    %c0_i32 = arith.constant 0 : i32
    %c0_i32_0 = arith.constant 0 : i32
    return %c0_i32, %arg1 : i32, i32
  }
  func.func @transform_9(%arg0: i32, %arg1: i32) -> (i32, i32) {
    %c0_i32 = arith.constant 0 : i32
    return %arg0, %arg1 : i32, i32
  }
}

</mosaic_0001>

<llo_original>
// kernel: conditional_g_forward.1
$region0: #{conditional_g_forward.1}
  #allocation0 [shape = 'u32[]', space=smem, size = 0x4, offset = 0x4, fixed_abs, tag = 'smem constant byte address 0x4 - core index']
  #allocation1 [shape = 'u32[72,128]{1,0:T(1,128)}', space=vmem, size = 0x9000, scoped, tag = 'internal scratch']
  #allocation2 [shape = 'bf16[8,256]{1,0:T(8,128)(2,1)}', space=vmem, size = 0x1000, scoped, tag = 'scratch operand']
  %s0 = inlined_call_operand.vmem [shape: bf16[16,128], index: 0, kind: input, shape index: {}]
  %s1 = inlined_call_operand.vmem [shape: f32[16,1], index: 1, kind: input, shape index: {}]
  %s2 = inlined_call_operand.vmem [shape: bf16[128,256], index: 2, kind: input, shape index: {}]
  %s3 = inlined_call_operand.vmem [shape: f32[1,256], index: 3, kind: input, shape index: {}]
  %s4 = inlined_call_operand.vmem [shape: f32[1,256], index: 4, kind: input, shape index: {}]
  %s5 = inlined_call_operand.vmem [shape: bf16[256,256], index: 5, kind: input, shape index: {}]
  %s6 = inlined_call_operand.vmem [shape: f32[1,256], index: 6, kind: input, shape index: {}]
  %s7 = inlined_call_operand.vmem [shape: bf16[256,256], index: 7, kind: input, shape index: {}]
  %s8 = inlined_call_operand.vmem [shape: f32[1,256], index: 8, kind: input, shape index: {}]
  %s9 = inlined_call_operand.vmem [shape: f32[16,256], index: 9, kind: output, shape index: {}]
  %s10 = sld [smem:[#allocation0]]
  $region73: #{conditional_g_forward.1} parent=0
    _
  %s12 = ssub.s32 1, %s10
  %s13 = scalar_select 0, %s12, %s10
  loop: start=0, step=1, limit=4
  $region2: #{conditional_g_forward.1} parent=0 // loop_pre_header
    _
  $region3: #{conditional_g_forward.1} parent=0 // loop_header
    %s15 = sphi 0, %s19
    %p16 = scmp.ge.s32.totalorder %s15, 4
    %s22 = sphi 0, %s34
    %s23 = sphi 0, %s30
    %s24 = sphi 0, %s22
    %s25 = sphi 0, %s23
    %s26 = sphi 0, %s24
    %s27 = sphi 0, %s25
    %s37 = sphi 0, %s39
    %s40 = sphi 0, %s37
    %s41 = sphi 0, %s40
    %s57 = sphi 0, %s41
    %s63 = sphi 0, %s65
    %s66 = sphi 0, %s63
    %s67 = sphi 0, %s66
    %s83 = sphi 0, %s67
    %s87 = sphi 0, %s87
    %s89 = sphi 0, %s87
    %s90 = sphi 0, %s89
    %s104 = sphi 0, %s90
    %s108 = sphi 0, %s108
    %s110 = sphi 0, %s108
    %s111 = sphi 0, %s110
    %s125 = sphi 0, %s111
    %s129 = sphi 0, %s129
    %s131 = sphi 0, %s129
    %s132 = sphi 0, %s131
    %s146 = sphi 0, %s132
    %s150 = sphi 0, %s150
    %s152 = sphi 0, %s150
    %s153 = sphi 0, %s152
    %s167 = sphi 0, %s153
    %s171 = sphi 0, %s171
    %s173 = sphi 0, %s171
    %s174 = sphi 0, %s173
    %s188 = sphi 0, %s174
    %s194 = sphi 0, %s196
    %s197 = sphi 0, %s194
    %s198 = sphi 0, %s197
    %s214 = sphi 0, %s198
    %s220 = sphi 0, %s222
    %s223 = sphi 0, %s220
    %s224 = sphi 0, %s223
    %s240 = sphi 0, %s224
    %s248 = sphi 0, %s250
    %s251 = sphi 0, %s248
    %s252 = sphi 0, %s251
    %s268 = sphi 0, %s252
  $region4: #{conditional_g_forward.1} parent=0 // loop_header_branch
    %18 = sbr.rel (%p16) target = $region8
  $region5: #{conditional_g_forward.1} parent=0 // loop_body
    %s20 = ssub.s32 %s15, 1
    %s21 = ssub.s32 %s15, 2
    %s28 = sadd.s32 1, %s23
    %p29 = scmp.ge.s32.totalorder %s28, 1
    %s30 = scalar_select %p29, 0, %s28
    %s31 = sadd.s32 1, %s22
    %s32 = scalar_select %p29, %s31, %s22
    %p33 = scmp.ge.s32.totalorder %s32, 2
    %s34 = scalar_select %p33, 0, %s32
    %s35 = ssub.s32 %s22, %s34
    %p36 = scmp.eq.s32.totalorder %s35, 0
    %s38 = sadd.s32 %s37, 1
    %s39 = scalar_select %p36, %s37, %s38
    %p42 = pneg %p36
    %p43 = scmp.eq.s32.totalorder %s15, 1
    %p44 = por %p42, %p43
    %p45 = scmp.ne.s32.totalorder %s37, %s40
    %p46 = scmp.eq.s32.totalorder %s15, 0
    %p47 = por %p45, %p46
    %p48 = scmp.ne.s32.totalorder %s37, %s40
    %p49 = scmp.eq.s32.totalorder %s20, 1
    %p50 = por %p48, %p49
    %p51 = scmp.ne.s32.totalorder %s40, %s41
    %p52 = scmp.eq.s32.totalorder %s20, 0
    %p53 = por %p51, %p52
    %p54 = scmp.ne.s32.totalorder %s40, %s41
    %p55 = scmp.eq.s32.totalorder %s21, 1
    %p56 = por %p54, %p55
    %p58 = scmp.ne.s32.totalorder %s41, %s57
    %p59 = scmp.eq.s32.totalorder %s21, 0
    %p60 = por %p58, %p59
    %s61 = ssub.s32 %s22, %s34
    %p62 = scmp.eq.s32.totalorder %s61, 0
    %s64 = sadd.s32 %s63, 1
    %s65 = scalar_select %p62, %s63, %s64
    %p68 = pneg %p62
    %p69 = scmp.eq.s32.totalorder %s15, 1
    %p70 = por %p68, %p69
    %p71 = scmp.ne.s32.totalorder %s63, %s66
    %p72 = scmp.eq.s32.totalorder %s15, 0
    %p73 = por %p71, %p72
    %p74 = scmp.ne.s32.totalorder %s63, %s66
    %p75 = scmp.eq.s32.totalorder %s20, 1
    %p76 = por %p74, %p75
    %p77 = scmp.ne.s32.totalorder %s66, %s67
    %p78 = scmp.eq.s32.totalorder %s20, 0
    %p79 = por %p77, %p78
    %p80 = scmp.ne.s32.totalorder %s66, %s67
    %p81 = scmp.eq.s32.totalorder %s21, 1
    %p82 = por %p80, %p81
    %p84 = scmp.ne.s32.totalorder %s67, %s83
    %p85 = scmp.eq.s32.totalorder %s21, 0
    %p86 = por %p84, %p85
    %s88 = sadd.s32 %s87, 1
    %p91 = scmp.eq.s32.totalorder %s15, 1
    %p92 = scmp.ne.s32.totalorder %s87, %s89
    %p93 = scmp.eq.s32.totalorder %s15, 0
    %p94 = por %p92, %p93
    %p95 = scmp.ne.s32.totalorder %s87, %s89
    %p96 = scmp.eq.s32.totalorder %s20, 1
    %p97 = por %p95, %p96
    %p98 = scmp.ne.s32.totalorder %s89, %s90
    %p99 = scmp.eq.s32.totalorder %s20, 0
    %p100 = por %p98, %p99
    %p101 = scmp.ne.s32.totalorder %s89, %s90
    %p102 = scmp.eq.s32.totalorder %s21, 1
    %p103 = por %p101, %p102
    %p105 = scmp.ne.s32.totalorder %s90, %s104
    %p106 = scmp.eq.s32.totalorder %s21, 0
    %p107 = por %p105, %p106
    %s109 = sadd.s32 %s108, 1
    %p112 = scmp.eq.s32.totalorder %s15, 1
    %p113 = scmp.ne.s32.totalorder %s108, %s110
    %p114 = scmp.eq.s32.totalorder %s15, 0
    %p115 = por %p113, %p114
    %p116 = scmp.ne.s32.totalorder %s108, %s110
    %p117 = scmp.eq.s32.totalorder %s20, 1
    %p118 = por %p116, %p117
    %p119 = scmp.ne.s32.totalorder %s110, %s111
    %p120 = scmp.eq.s32.totalorder %s20, 0
    %p121 = por %p119, %p120
    %p122 = scmp.ne.s32.totalorder %s110, %s111
    %p123 = scmp.eq.s32.totalorder %s21, 1
    %p124 = por %p122, %p123
    %p126 = scmp.ne.s32.totalorder %s111, %s125
    %p127 = scmp.eq.s32.totalorder %s21, 0
    %p128 = por %p126, %p127
    %s130 = sadd.s32 %s129, 1
    %p133 = scmp.eq.s32.totalorder %s15, 1
    %p134 = scmp.ne.s32.totalorder %s129, %s131
    %p135 = scmp.eq.s32.totalorder %s15, 0
    %p136 = por %p134, %p135
    %p137 = scmp.ne.s32.totalorder %s129, %s131
    %p138 = scmp.eq.s32.totalorder %s20, 1
    %p139 = por %p137, %p138
    %p140 = scmp.ne.s32.totalorder %s131, %s132
    %p141 = scmp.eq.s32.totalorder %s20, 0
    %p142 = por %p140, %p141
    %p143 = scmp.ne.s32.totalorder %s131, %s132
    %p144 = scmp.eq.s32.totalorder %s21, 1
    %p145 = por %p143, %p144
    %p147 = scmp.ne.s32.totalorder %s132, %s146
    %p148 = scmp.eq.s32.totalorder %s21, 0
    %p149 = por %p147, %p148
    %s151 = sadd.s32 %s150, 1
    %p154 = scmp.eq.s32.totalorder %s15, 1
    %p155 = scmp.ne.s32.totalorder %s150, %s152
    %p156 = scmp.eq.s32.totalorder %s15, 0
    %p157 = por %p155, %p156
    %p158 = scmp.ne.s32.totalorder %s150, %s152
    %p159 = scmp.eq.s32.totalorder %s20, 1
    %p160 = por %p158, %p159
    %p161 = scmp.ne.s32.totalorder %s152, %s153
    %p162 = scmp.eq.s32.totalorder %s20, 0
    %p163 = por %p161, %p162
    %p164 = scmp.ne.s32.totalorder %s152, %s153
    %p165 = scmp.eq.s32.totalorder %s21, 1
    %p166 = por %p164, %p165
    %p168 = scmp.ne.s32.totalorder %s153, %s167
    %p169 = scmp.eq.s32.totalorder %s21, 0
    %p170 = por %p168, %p169
    %s172 = sadd.s32 %s171, 1
    %p175 = scmp.eq.s32.totalorder %s15, 1
    %p176 = scmp.ne.s32.totalorder %s171, %s173
    %p177 = scmp.eq.s32.totalorder %s15, 0
    %p178 = por %p176, %p177
    %p179 = scmp.ne.s32.totalorder %s171, %s173
    %p180 = scmp.eq.s32.totalorder %s20, 1
    %p181 = por %p179, %p180
    %p182 = scmp.ne.s32.totalorder %s173, %s174
    %p183 = scmp.eq.s32.totalorder %s20, 0
    %p184 = por %p182, %p183
    %p185 = scmp.ne.s32.totalorder %s173, %s174
    %p186 = scmp.eq.s32.totalorder %s21, 1
    %p187 = por %p185, %p186
    %p189 = scmp.ne.s32.totalorder %s174, %s188
    %p190 = scmp.eq.s32.totalorder %s21, 0
    %p191 = por %p189, %p190
    %s192 = ssub.s32 %s23, %s30
    %p193 = scmp.eq.s32.totalorder %s192, 0
    %s195 = sadd.s32 %s194, 1
    %s196 = scalar_select %p193, %s194, %s195
    %p199 = pneg %p193
    %p200 = scmp.eq.s32.totalorder %s15, 1
    %p201 = por %p199, %p200
    %p202 = scmp.ne.s32.totalorder %s194, %s197
    %p203 = scmp.eq.s32.totalorder %s15, 0
    %p204 = por %p202, %p203
    %p205 = scmp.ne.s32.totalorder %s194, %s197
    %p206 = scmp.eq.s32.totalorder %s20, 1
    %p207 = por %p205, %p206
    %p208 = scmp.ne.s32.totalorder %s197, %s198
    %p209 = scmp.eq.s32.totalorder %s20, 0
    %p210 = por %p208, %p209
    %p211 = scmp.ne.s32.totalorder %s197, %s198
    %p212 = scmp.eq.s32.totalorder %s21, 1
    %p213 = por %p211, %p212
    %p215 = scmp.ne.s32.totalorder %s198, %s214
    %p216 = scmp.eq.s32.totalorder %s21, 0
    %p217 = por %p215, %p216
    %s218 = ssub.s32 %s23, %s30
    %p219 = scmp.eq.s32.totalorder %s218, 0
    %s221 = sadd.s32 %s220, 1
    %s222 = scalar_select %p219, %s220, %s221
    %p225 = pneg %p219
    %p226 = scmp.eq.s32.totalorder %s15, 1
    %p227 = por %p225, %p226
    %p228 = scmp.ne.s32.totalorder %s220, %s223
    %p229 = scmp.eq.s32.totalorder %s15, 0
    %p230 = por %p228, %p229
    %p231 = scmp.ne.s32.totalorder %s220, %s223
    %p232 = scmp.eq.s32.totalorder %s20, 1
    %p233 = por %p231, %p232
    %p234 = scmp.ne.s32.totalorder %s223, %s224
    %p235 = scmp.eq.s32.totalorder %s20, 0
    %p236 = por %p234, %p235
    %p237 = scmp.ne.s32.totalorder %s223, %s224
    %p238 = scmp.eq.s32.totalorder %s21, 1
    %p239 = por %p237, %p238
    %p241 = scmp.ne.s32.totalorder %s224, %s240
    %p242 = scmp.eq.s32.totalorder %s21, 0
    %p243 = por %p241, %p242
    %s244 = ssub.s32 %s22, %s34
    %s245 = ssub.s32 %s23, %s30
    %s246 = sor.u32 %s244, %s245
    %p247 = scmp.eq.s32.totalorder %s246, 0
    %s249 = sadd.s32 %s248, 1
    %s250 = scalar_select %p247, %s248, %s249
    %p253 = pneg %p247
    %p254 = scmp.eq.s32.totalorder %s15, 1
    %p255 = por %p253, %p254
    %p256 = scmp.ne.s32.totalorder %s248, %s251
    %p257 = scmp.eq.s32.totalorder %s15, 0
    %p258 = por %p256, %p257
    %p259 = scmp.ne.s32.totalorder %s248, %s251
    %p260 = scmp.eq.s32.totalorder %s20, 1
    %p261 = por %p259, %p260
    %p262 = scmp.ne.s32.totalorder %s251, %s252
    %p263 = scmp.eq.s32.totalorder %s20, 0
    %p264 = por %p262, %p263
    %p265 = scmp.ne.s32.totalorder %s251, %s252
    %p266 = scmp.eq.s32.totalorder %s21, 1
    %p267 = por %p265, %p266
    %p269 = scmp.ne.s32.totalorder %s252, %s268
    %p270 = scmp.eq.s32.totalorder %s21, 0
    %p271 = por %p269, %p270
    %p272 = scmp.le.s32.totalorder 1, %s15
    %p273 = scmp.lt.s32.totalorder %s15, 3
    %p274 = pnand %p272, %p273
    %p275 = pneg %p274
    // Predicated region
    $region9: #{conditional_g_forward.1} parent=5 // pred_check
      _
    $region10: #{conditional_g_forward.1} parent=5 // pred_check_branch
      %277 = sbr.rel (%p274) target = $region12
    $region11: #{conditional_g_forward.1} parent=5 // pred_region
      %s278 = ssub.s32 %s15, 1
      // Predicated region
      $region13: #{conditional_g_forward.1} parent=11 // pred_check
        %p279 = pneg %p100
      $region14: #{conditional_g_forward.1} parent=11 // pred_check_branch
        %281 = sbr.rel (%p279) target = $region16
      $region15: #{conditional_g_forward.1} parent=11 // pred_region
        _
      $region16: #{conditional_g_forward.1} parent=11 // pred_fallthru
        _
      // Predicated region
      $region17: #{conditional_g_forward.1} parent=11 // pred_check
        %p282 = pneg %p121
      $region18: #{conditional_g_forward.1} parent=11 // pred_check_branch
        %284 = sbr.rel (%p282) target = $region20
      $region19: #{conditional_g_forward.1} parent=11 // pred_region
        _
      $region20: #{conditional_g_forward.1} parent=11 // pred_fallthru
        _
      // Predicated region
      $region21: #{conditional_g_forward.1} parent=11 // pred_check
        %p285 = pneg %p142
      $region22: #{conditional_g_forward.1} parent=11 // pred_check_branch
        %287 = sbr.rel (%p285) target = $region24
      $region23: #{conditional_g_forward.1} parent=11 // pred_region
        _
      $region24: #{conditional_g_forward.1} parent=11 // pred_fallthru
        _
      // Predicated region
      $region25: #{conditional_g_forward.1} parent=11 // pred_check
        %p288 = pneg %p163
      $region26: #{conditional_g_forward.1} parent=11 // pred_check_branch
        %290 = sbr.rel (%p288) target = $region28
      $region27: #{conditional_g_forward.1} parent=11 // pred_region
        _
      $region28: #{conditional_g_forward.1} parent=11 // pred_fallthru
        _
      // Predicated region
      $region29: #{conditional_g_forward.1} parent=11 // pred_check
        %p291 = pneg %p184
      $region30: #{conditional_g_forward.1} parent=11 // pred_check_branch
        %293 = sbr.rel (%p291) target = $region32
      $region31: #{conditional_g_forward.1} parent=11 // pred_region
        _
      $region32: #{conditional_g_forward.1} parent=11 // pred_fallthru
        _
      // Predicated region
      $region33: #{conditional_g_forward.1} parent=11 // pred_check
        %p294 = pneg %p210
      $region34: #{conditional_g_forward.1} parent=11 // pred_check_branch
        %296 = sbr.rel (%p294) target = $region36
      $region35: #{conditional_g_forward.1} parent=11 // pred_region
        %s297 = smul.u32 2, %s25
        %p298 = scmp.lt.s32.totalorder %s297, 1
        %s299 = scalar_select %p298, %s297, 1
        %s300 = smul.addr %s299, 4
        %s301 = scalar_lea.vmem %s7, %s300
        %s302 = smul.u32 2, %s25
      $region36: #{conditional_g_forward.1} parent=11 // pred_fallthru
        _
      // Predicated region
      $region37: #{conditional_g_forward.1} parent=11 // pred_check
        %p303 = pneg %p236
      $region38: #{conditional_g_forward.1} parent=11 // pred_check_branch
        %305 = sbr.rel (%p303) target = $region40
      $region39: #{conditional_g_forward.1} parent=11 // pred_region
        %s306 = smul.u32 2, %s25
        %p307 = scmp.lt.s32.totalorder %s306, 1
        %s308 = scalar_select %p307, %s306, 1
        %s309 = scalar_lea.vmem %s8, %s308
        %s310 = smul.u32 2, %s25
      $region40: #{conditional_g_forward.1} parent=11 // pred_fallthru
        _
    $region12: #{conditional_g_forward.1} parent=5 // pred_fallthru
      _
    %p311 = scmp.lt.s32.totalorder %s15, 2
    // Predicated region
    $region41: #{conditional_g_forward.1} parent=5 // pred_check
      %p312 = pneg %p311
    $region42: #{conditional_g_forward.1} parent=5 // pred_check_branch
      %314 = sbr.rel (%p312) target = $region44
    $region43: #{conditional_g_forward.1} parent=5 // pred_region
      // Predicated region
      $region45: #{conditional_g_forward.1} parent=43 // pred_check
        %p315 = pneg %p47
      $region46: #{conditional_g_forward.1} parent=43 // pred_check_branch
        %317 = sbr.rel (%p315) target = $region48
      $region47: #{conditional_g_forward.1} parent=43 // pred_region
        %p318 = scmp.lt.s32.totalorder %s22, 1
        %s319 = scalar_select %p318, %s22, 1
        %s320 = smul.addr %s319, 4
        %s321 = scalar_lea.vmem %s0, %s320
      $region48: #{conditional_g_forward.1} parent=43 // pred_fallthru
        _
      // Predicated region
      $region49: #{conditional_g_forward.1} parent=43 // pred_check
        %p322 = pneg %p73
      $region50: #{conditional_g_forward.1} parent=43 // pred_check_branch
        %324 = sbr.rel (%p322) target = $region52
      $region51: #{conditional_g_forward.1} parent=43 // pred_region
        %p325 = scmp.lt.s32.totalorder %s22, 1
        %s326 = scalar_select %p325, %s22, 1
        %s327 = smul.addr %s326, 8
        %s328 = scalar_lea.vmem %s1, %s327
      $region52: #{conditional_g_forward.1} parent=43 // pred_fallthru
        _
    $region44: #{conditional_g_forward.1} parent=5 // pred_fallthru
      _
    %p329 = scmp.le.s32.totalorder 1, %s15
    %p330 = scmp.lt.s32.totalorder %s15, 3
    %p331 = pnand %p329, %p330
    %p332 = pneg %p331
    // Predicated region
    $region53: #{conditional_g_forward.1} parent=5 // pred_check
      _
    $region54: #{conditional_g_forward.1} parent=5 // pred_check_branch
      %334 = sbr.rel (%p331) target = $region56
    $region55: #{conditional_g_forward.1} parent=5 // pred_region
      %s335 = ssub.s32 %s15, 1
      %p336 = scmp.lt.s32.totalorder %s24, 1
      %s337 = scalar_select %p336, %s24, 1
      %s338 = smul.addr %s337, 4
      %s339 = scalar_lea.vmem %s0, %s338
      %p340 = pneg %p53
      %p341 = pneg %p50
      %p342 = scmp.lt.s32.totalorder %s24, 1
      %s343 = scalar_select %p342, %s24, 1
      %s344 = smul.addr %s343, 8
      %s345 = scalar_lea.vmem %s1, %s344
      %p346 = pneg %p79
      %p347 = pneg %p76
      %p348 = pneg %p100
      %p349 = pneg %p97
      %p350 = pneg %p121
      %p351 = pneg %p118
      %p352 = pneg %p142
      %p353 = pneg %p139
      %p354 = pneg %p163
      %p355 = pneg %p160
      %p356 = pneg %p184
      %p357 = pneg %p181
      %s358 = smul.u32 2, %s25
      %p359 = scmp.lt.s32.totalorder %s358, 1
      %s360 = scalar_select %p359, %s358, 1
      %s361 = smul.addr %s360, 4
      %s362 = scalar_lea.vmem %s7, %s361
      %p363 = pneg %p210
      %p364 = pneg %p207
      %s365 = smul.u32 2, %s25
      %p366 = scmp.lt.s32.totalorder %s365, 1
      %s367 = scalar_select %p366, %s365, 1
      %s368 = scalar_lea.vmem %s8, %s367
      %p369 = pneg %p236
      %p370 = pneg %p233
      %p371 = pneg %p264
      %p372 = pneg %p261
      %s373 = smul.u32 2, %s25
      %p374 = scmp.lt.s32.totalorder %s24, 1
      %s375 = scalar_select %p374, %s24, 1
      %p376 = scmp.lt.s32.totalorder %s373, 1
      %s377 = scalar_select %p376, %s373, 1
      %s378 = smul.addr %s375, 2
      %s379 = sadd.s32 %s377, %s378
      %s380 = smul.addr %s379, 8
      %s381 = scalar_lea.vmem %s9, %s380
      %p382 = scmp.lt.s32.totalorder %s24, 1
      %s383 = scalar_select %p382, %s24, 1
      %s384 = smul.addr %s383, 4
      %s385 = scalar_lea.vmem %s0, %s384
      %p386 = scmp.lt.s32.totalorder %s24, 1
      %s387 = scalar_select %p386, %s24, 1
      %s388 = smul.addr %s387, 8
      %s389 = scalar_lea.vmem %s1, %s388
      %s390 = smul.u32 2, %s25
      %p391 = scmp.lt.s32.totalorder %s390, 1
      %s392 = scalar_select %p391, %s390, 1
      %s393 = smul.addr %s392, 4
      %s394 = scalar_lea.vmem %s7, %s393
      %s395 = smul.u32 2, %s25
      %s396 = smul.u32 2, %s25
      %p397 = scmp.lt.s32.totalorder %s396, 1
      %s398 = scalar_select %p397, %s396, 1
      %s399 = scalar_lea.vmem %s8, %s398
      %s400 = smul.u32 2, %s25
      %s401 = smul.u32 2, %s25
      %p402 = scmp.lt.s32.totalorder %s24, 1
      %s403 = scalar_select %p402, %s24, 1
      %p404 = scmp.lt.s32.totalorder %s401, 1
      %s405 = scalar_select %p404, %s401, 1
      %s406 = smul.addr %s403, 2
      %s407 = sadd.s32 %s405, %s406
      %s408 = smul.addr %s407, 8
      %s409 = scalar_lea.vmem %s9, %s408
      %s410 = smul.u32 2, %s25
      %p411 = scmp.eq.s32.totalorder %s25, 0
      // Predicated region
      $region57: #{conditional_g_forward.1} parent=55 // pred_check
        %p412 = pneg %p411
      $region58: #{conditional_g_forward.1} parent=55 // pred_check_branch
        %414 = sbr.rel (%p412) target = $region60
      $region59: #{conditional_g_forward.1} parent=55 // pred_region
        %v415 = vld [vmem:[%s385] sm:$0xf]
        %v416 = vld [vmem:[%s2] sm:$0xff]
        %v417 = vld [vmem:[%s2 + $0x8] sm:$0xff]
        %v418 = vld [vmem:[%s2 + $0x10] sm:$0xff]
        %v419 = vld [vmem:[%s2 + $0x18] sm:$0xff]
        %v420 = vld [vmem:[%s2 + $0x20] sm:$0xff]
        %v421 = vld [vmem:[%s2 + $0x28] sm:$0xff]
        %v422 = vld [vmem:[%s2 + $0x30] sm:$0xff]
        %v423 = vld [vmem:[%s2 + $0x38] sm:$0xff]
        %v424 = vld [vmem:[%s2 + $0x40] sm:$0xff]
        %v425 = vld [vmem:[%s2 + $0x48] sm:$0xff]
        %v426 = vld [vmem:[%s2 + $0x50] sm:$0xff]
        %v427 = vld [vmem:[%s2 + $0x58] sm:$0xff]
        %v428 = vld [vmem:[%s2 + $0x60] sm:$0xff]
        %v429 = vld [vmem:[%s2 + $0x68] sm:$0xff]
        %v430 = vld [vmem:[%s2 + $0x70] sm:$0xff]
        %v431 = vld [vmem:[%s2 + $0x78] sm:$0xff]
        %v432 = vld [vmem:[%s389] sm:$0xff]
        %v433 = vld [vmem:[%s3] sm:$0x3]
        %435 = vset.pattern.permute.xlu0 0
        %436 = vperm.xlu0 %435, %v432
        %v437 = vpop.permute.xlu0 %436
        %v440 = vperm.slane %v433, 0
        %v441 = vperm.slane %v433, 1
        %v444 = vmul.f32 %v437, %v440
        %v445 = vmul.f32 %v437, %v441
        %v462 = vunpack.c.l.b16 %v416
        %v463 = vunpack.c.h.b16 %v416
        %v464 = vunpack.c.l.b16 %v417
        %v465 = vunpack.c.h.b16 %v417
        %v466 = vunpack.c.l.b16 %v418
        %v467 = vunpack.c.h.b16 %v418
        %v468 = vunpack.c.l.b16 %v419
        %v469 = vunpack.c.h.b16 %v419
        %v470 = vunpack.c.l.b16 %v420
        %v471 = vunpack.c.h.b16 %v420
        %v472 = vunpack.c.l.b16 %v421
        %v473 = vunpack.c.h.b16 %v421
        %v474 = vunpack.c.l.b16 %v422
        %v475 = vunpack.c.h.b16 %v422
        %v476 = vunpack.c.l.b16 %v423
        %v477 = vunpack.c.h.b16 %v423
        %v478 = vunpack.c.l.b16 %v424
        %v479 = vunpack.c.h.b16 %v424
        %v480 = vunpack.c.l.b16 %v425
        %v481 = vunpack.c.h.b16 %v425
        %v482 = vunpack.c.l.b16 %v426
        %v483 = vunpack.c.h.b16 %v426
        %v484 = vunpack.c.l.b16 %v427
        %v485 = vunpack.c.h.b16 %v427
        %v486 = vunpack.c.l.b16 %v428
        %v487 = vunpack.c.h.b16 %v428
        %v488 = vunpack.c.l.b16 %v429
        %v489 = vunpack.c.h.b16 %v429
        %v490 = vunpack.c.l.b16 %v430
        %v491 = vunpack.c.h.b16 %v430
        %v492 = vunpack.c.l.b16 %v431
        %v493 = vunpack.c.h.b16 %v431
        %v494 = vpack.c.b16 %v464, %v462
        %v495 = vpack.c.b16 %v465, %v463
        %v496 = vpack.c.b16 %v468, %v466
        %v497 = vpack.c.b16 %v469, %v467
        %v498 = vpack.c.b16 %v472, %v470
        %v499 = vpack.c.b16 %v473, %v471
        %v500 = vpack.c.b16 %v476, %v474
        %v501 = vpack.c.b16 %v477, %v475
        %v502 = vpack.c.b16 %v480, %v478
        %v503 = vpack.c.b16 %v481, %v479
        %v504 = vpack.c.b16 %v484, %v482
        %v505 = vpack.c.b16 %v485, %v483
        %v506 = vpack.c.b16 %v488, %v486
        %v507 = vpack.c.b16 %v489, %v487
        %v508 = vpack.c.b16 %v492, %v490
        %v509 = vpack.c.b16 %v493, %v491
        %526 = vmatpush.bf16.msra.mxu0 %v508
        %527 = vmatpush.bf16.msra.mxu0 %v506
        %528 = vmatpush.bf16.msra.mxu0 %v504
        %529 = vmatpush.bf16.msra.mxu0 %v502
        %530 = vmatpush.bf16.msra.mxu0 %v500
        %531 = vmatpush.bf16.msra.mxu0 %v498
        %532 = vmatpush.bf16.msra.mxu0 %v496
        %533 = vmatpush.bf16.msra.mxu0 %v494
        %534 = vmatmul.bf16.gmra.mxu0 %v415
        %v535 = vpop.f32.mrf.mxu0
        %v536 = vadd.f32 %v444, %v535
        %v537 = vpop.f32.mrf.mxu0
        %538 = vdwg.mxu0
        %539 = vmatpush.bf16.msra.mxu0 %v509
        %540 = vmatpush.bf16.msra.mxu0 %v507
        %541 = vmatpush.bf16.msra.mxu0 %v505
        %542 = vmatpush.bf16.msra.mxu0 %v503
        %543 = vmatpush.bf16.msra.mxu0 %v501
        %544 = vmatpush.bf16.msra.mxu0 %v499
        %545 = vmatpush.bf16.msra.mxu0 %v497
        %546 = vmatpush.bf16.msra.mxu0 %v495
        %547 = vmatmul.bf16.gmra.mxu0 %v415
        %v548 = vpop.f32.mrf.mxu0
        %v549 = vadd.f32 %v445, %v548
        %v550 = vpop.f32.mrf.mxu0
        %551 = vdwg.mxu0
        %v552 = vld [vmem:[%s4] sm:$0x3]
        %v554 = vperm.slane %v552, 0
        %v555 = vperm.slane %v552, 1
        %v558 = vadd.f32 %v536, %v554
        %v559 = vadd.f32 %v549, %v555
        %v560 = vmax.f32 %v558, 0.0
        %v561 = vmax.f32 %v559, 0.0
        %v562 = vpack.c.bf16 %v560, %v560
        %v563 = vpack.c.bf16 %v561, %v561
        %v564 = vld [vmem:[%s5] sm:$0xff]
        %v565 = vld [vmem:[%s5 + $0x8] sm:$0xff]
        %v566 = vld [vmem:[%s5 + $0x10] sm:$0xff]
        %v567 = vld [vmem:[%s5 + $0x18] sm:$0xff]
        %v568 = vld [vmem:[%s5 + $0x20] sm:$0xff]
        %v569 = vld [vmem:[%s5 + $0x28] sm:$0xff]
        %v570 = vld [vmem:[%s5 + $0x30] sm:$0xff]
        %v571 = vld [vmem:[%s5 + $0x38] sm:$0xff]
        %v572 = vld [vmem:[%s5 + $0x40] sm:$0xff]
        %v573 = vld [vmem:[%s5 + $0x48] sm:$0xff]
        %v574 = vld [vmem:[%s5 + $0x50] sm:$0xff]
        %v575 = vld [vmem:[%s5 + $0x58] sm:$0xff]
        %v576 = vld [vmem:[%s5 + $0x60] sm:$0xff]
        %v577 = vld [vmem:[%s5 + $0x68] sm:$0xff]
        %v578 = vld [vmem:[%s5 + $0x70] sm:$0xff]
        %v579 = vld [vmem:[%s5 + $0x78] sm:$0xff]
        %v580 = vld [vmem:[%s5 + $0x80] sm:$0xff]
        %v581 = vld [vmem:[%s5 + $0x88] sm:$0xff]
        %v582 = vld [vmem:[%s5 + $0x90] sm:$0xff]
        %v583 = vld [vmem:[%s5 + $0x98] sm:$0xff]
        %v584 = vld [vmem:[%s5 + $0xa0] sm:$0xff]
        %v585 = vld [vmem:[%s5 + $0xa8] sm:$0xff]
        %v586 = vld [vmem:[%s5 + $0xb0] sm:$0xff]
        %v587 = vld [vmem:[%s5 + $0xb8] sm:$0xff]
        %v588 = vld [vmem:[%s5 + $0xc0] sm:$0xff]
        %v589 = vld [vmem:[%s5 + $0xc8] sm:$0xff]
        %v590 = vld [vmem:[%s5 + $0xd0] sm:$0xff]
        %v591 = vld [vmem:[%s5 + $0xd8] sm:$0xff]
        %v592 = vld [vmem:[%s5 + $0xe0] sm:$0xff]
        %v593 = vld [vmem:[%s5 + $0xe8] sm:$0xff]
        %v594 = vld [vmem:[%s5 + $0xf0] sm:$0xff]
        %v595 = vld [vmem:[%s5 + $0xf8] sm:$0xff]
        %v596 = vld [vmem:[%s6] sm:$0x3]
        %v598 = vperm.slane %v596, 0
        %v599 = vperm.slane %v596, 1
        %v634 = vunpack.c.l.b16 %v564
        %v635 = vunpack.c.h.b16 %v564
        %v636 = vunpack.c.l.b16 %v565
        %v637 = vunpack.c.h.b16 %v565
        %v638 = vunpack.c.l.b16 %v566
        %v639 = vunpack.c.h.b16 %v566
        %v640 = vunpack.c.l.b16 %v567
        %v641 = vunpack.c.h.b16 %v567
        %v642 = vunpack.c.l.b16 %v568
        %v643 = vunpack.c.h.b16 %v568
        %v644 = vunpack.c.l.b16 %v569
        %v645 = vunpack.c.h.b16 %v569
        %v646 = vunpack.c.l.b16 %v570
        %v647 = vunpack.c.h.b16 %v570
        %v648 = vunpack.c.l.b16 %v571
        %v649 = vunpack.c.h.b16 %v571
        %v650 = vunpack.c.l.b16 %v572
        %v651 = vunpack.c.h.b16 %v572
        %v652 = vunpack.c.l.b16 %v573
        %v653 = vunpack.c.h.b16 %v573
        %v654 = vunpack.c.l.b16 %v574
        %v655 = vunpack.c.h.b16 %v574
        %v656 = vunpack.c.l.b16 %v575
        %v657 = vunpack.c.h.b16 %v575
        %v658 = vunpack.c.l.b16 %v576
        %v659 = vunpack.c.h.b16 %v576
        %v660 = vunpack.c.l.b16 %v577
        %v661 = vunpack.c.h.b16 %v577
        %v662 = vunpack.c.l.b16 %v578
        %v663 = vunpack.c.h.b16 %v578
        %v664 = vunpack.c.l.b16 %v579
        %v665 = vunpack.c.h.b16 %v579
        %v666 = vunpack.c.l.b16 %v580
        %v667 = vunpack.c.h.b16 %v580
        %v668 = vunpack.c.l.b16 %v581
        %v669 = vunpack.c.h.b16 %v581
        %v670 = vunpack.c.l.b16 %v582
        %v671 = vunpack.c.h.b16 %v582
        %v672 = vunpack.c.l.b16 %v583
        %v673 = vunpack.c.h.b16 %v583
        %v674 = vunpack.c.l.b16 %v584
        %v675 = vunpack.c.h.b16 %v584
        %v676 = vunpack.c.l.b16 %v585
        %v677 = vunpack.c.h.b16 %v585
        %v678 = vunpack.c.l.b16 %v586
        %v679 = vunpack.c.h.b16 %v586
        %v680 = vunpack.c.l.b16 %v587
        %v681 = vunpack.c.h.b16 %v587
        %v682 = vunpack.c.l.b16 %v588
        %v683 = vunpack.c.h.b16 %v588
        %v684 = vunpack.c.l.b16 %v589
        %v685 = vunpack.c.h.b16 %v589
        %v686 = vunpack.c.l.b16 %v590
        %v687 = vunpack.c.h.b16 %v590
        %v688 = vunpack.c.l.b16 %v591
        %v689 = vunpack.c.h.b16 %v591
        %v690 = vunpack.c.l.b16 %v592
        %v691 = vunpack.c.h.b16 %v592
        %v692 = vunpack.c.l.b16 %v593
        %v693 = vunpack.c.h.b16 %v593
        %v694 = vunpack.c.l.b16 %v594
        %v695 = vunpack.c.h.b16 %v594
        %v696 = vunpack.c.l.b16 %v595
        %v697 = vunpack.c.h.b16 %v595
        %v698 = vpack.c.b16 %v636, %v634
        %v699 = vpack.c.b16 %v637, %v635
        %v700 = vpack.c.b16 %v640, %v638
        %v701 = vpack.c.b16 %v641, %v639
        %v702 = vpack.c.b16 %v644, %v642
        %v703 = vpack.c.b16 %v645, %v643
        %v704 = vpack.c.b16 %v648, %v646
        %v705 = vpack.c.b16 %v649, %v647
        %v706 = vpack.c.b16 %v652, %v650
        %v707 = vpack.c.b16 %v653, %v651
        %v708 = vpack.c.b16 %v656, %v654
        %v709 = vpack.c.b16 %v657, %v655
        %v710 = vpack.c.b16 %v660, %v658
        %v711 = vpack.c.b16 %v661, %v659
        %v712 = vpack.c.b16 %v664, %v662
        %v713 = vpack.c.b16 %v665, %v663
        %v714 = vpack.c.b16 %v668, %v666
        %v715 = vpack.c.b16 %v669, %v667
        %v716 = vpack.c.b16 %v672, %v670
        %v717 = vpack.c.b16 %v673, %v671
        %v718 = vpack.c.b16 %v676, %v674
        %v719 = vpack.c.b16 %v677, %v675
        %v720 = vpack.c.b16 %v680, %v678
        %v721 = vpack.c.b16 %v681, %v679
        %v722 = vpack.c.b16 %v684, %v682
        %v723 = vpack.c.b16 %v685, %v683
        %v724 = vpack.c.b16 %v688, %v686
        %v725 = vpack.c.b16 %v689, %v687
        %v726 = vpack.c.b16 %v692, %v690
        %v727 = vpack.c.b16 %v693, %v691
        %v728 = vpack.c.b16 %v696, %v694
        %v729 = vpack.c.b16 %v697, %v695
        %762 = vmatpush.bf16.msra.mxu0 %v712
        %763 = vmatpush.bf16.msra.mxu0 %v710
        %764 = vmatpush.bf16.msra.mxu0 %v708
        %765 = vmatpush.bf16.msra.mxu0 %v706
        %766 = vmatpush.bf16.msra.mxu0 %v704
        %767 = vmatpush.bf16.msra.mxu0 %v702
        %768 = vmatpush.bf16.msra.mxu0 %v700
        %769 = vmatpush.bf16.msra.mxu0 %v698
        %770 = vmatmul.bf16.gmra.mxu0 %v562
        %v771 = vpop.f32.mrf.mxu0
        %v772 = vadd.f32 %v598, %v771
        %v773 = vpop.f32.mrf.mxu0
        %774 = vdwg.mxu0
        %775 = vmatpush.bf16.msra.mxu0 %v728
        %776 = vmatpush.bf16.msra.mxu0 %v726
        %777 = vmatpush.bf16.msra.mxu0 %v724
        %778 = vmatpush.bf16.msra.mxu0 %v722
        %779 = vmatpush.bf16.msra.mxu0 %v720
        %780 = vmatpush.bf16.msra.mxu0 %v718
        %781 = vmatpush.bf16.msra.mxu0 %v716
        %782 = vmatpush.bf16.msra.mxu0 %v714
        %783 = vmatmul.bf16.gmra.mxu0 %v563
        %v784 = vpop.f32.mrf.mxu0
        %v785 = vadd.f32 %v772, %v784
        %v786 = vpop.f32.mrf.mxu0
        %787 = vdwg.mxu0
        %788 = vmatpush.bf16.msra.mxu0 %v713
        %789 = vmatpush.bf16.msra.mxu0 %v711
        %790 = vmatpush.bf16.msra.mxu0 %v709
        %791 = vmatpush.bf16.msra.mxu0 %v707
        %792 = vmatpush.bf16.msra.mxu0 %v705
        %793 = vmatpush.bf16.msra.mxu0 %v703
        %794 = vmatpush.bf16.msra.mxu0 %v701
        %795 = vmatpush.bf16.msra.mxu0 %v699
        %796 = vmatmul.bf16.gmra.mxu0 %v562
        %v797 = vpop.f32.mrf.mxu0
        %v798 = vadd.f32 %v599, %v797
        %v799 = vpop.f32.mrf.mxu0
        %800 = vdwg.mxu0
        %801 = vmatpush.bf16.msra.mxu0 %v729
        %802 = vmatpush.bf16.msra.mxu0 %v727
        %803 = vmatpush.bf16.msra.mxu0 %v725
        %804 = vmatpush.bf16.msra.mxu0 %v723
        %805 = vmatpush.bf16.msra.mxu0 %v721
        %806 = vmatpush.bf16.msra.mxu0 %v719
        %807 = vmatpush.bf16.msra.mxu0 %v717
        %808 = vmatpush.bf16.msra.mxu0 %v715
        %809 = vmatmul.bf16.gmra.mxu0 %v563
        %v810 = vpop.f32.mrf.mxu0
        %v811 = vadd.f32 %v798, %v810
        %v812 = vpop.f32.mrf.mxu0
        %813 = vdwg.mxu0
        %v814 = vmax.f32 %v785, 0.0
        %v815 = vmax.f32 %v811, 0.0
        %v816 = vpack.c.bf16 %v815, %v814
        %817 = vst [vmem:[#allocation2] sm:$0xff] %v816
      $region60: #{conditional_g_forward.1} parent=55 // pred_fallthru
        _
      %v818 = vld [vmem:[#allocation2] sm:$0xff]
      %v819 = vld [vmem:[%s394] sm:$0xff]
      %v820 = vld [vmem:[%s394 + $0x8] sm:$0xff]
      %v821 = vld [vmem:[%s394 + $0x10] sm:$0xff]
      %v822 = vld [vmem:[%s394 + $0x18] sm:$0xff]
      %v823 = vld [vmem:[%s394 + $0x20] sm:$0xff]
      %v824 = vld [vmem:[%s394 + $0x28] sm:$0xff]
      %v825 = vld [vmem:[%s394 + $0x30] sm:$0xff]
      %v826 = vld [vmem:[%s394 + $0x38] sm:$0xff]
      %v827 = vld [vmem:[%s394 + $0x40] sm:$0xff]
      %v828 = vld [vmem:[%s394 + $0x48] sm:$0xff]
      %v829 = vld [vmem:[%s394 + $0x50] sm:$0xff]
      %v830 = vld [vmem:[%s394 + $0x58] sm:$0xff]
      %v831 = vld [vmem:[%s394 + $0x60] sm:$0xff]
      %v832 = vld [vmem:[%s394 + $0x68] sm:$0xff]
      %v833 = vld [vmem:[%s394 + $0x70] sm:$0xff]
      %v834 = vld [vmem:[%s394 + $0x78] sm:$0xff]
      %v835 = vld [vmem:[%s394 + $0x80] sm:$0xff]
      %v836 = vld [vmem:[%s394 + $0x88] sm:$0xff]
      %v837 = vld [vmem:[%s394 + $0x90] sm:$0xff]
      %v838 = vld [vmem:[%s394 + $0x98] sm:$0xff]
      %v839 = vld [vmem:[%s394 + $0xa0] sm:$0xff]
      %v840 = vld [vmem:[%s394 + $0xa8] sm:$0xff]
      %v841 = vld [vmem:[%s394 + $0xb0] sm:$0xff]
      %v842 = vld [vmem:[%s394 + $0xb8] sm:$0xff]
      %v843 = vld [vmem:[%s394 + $0xc0] sm:$0xff]
      %v844 = vld [vmem:[%s394 + $0xc8] sm:$0xff]
      %v845 = vld [vmem:[%s394 + $0xd0] sm:$0xff]
      %v846 = vld [vmem:[%s394 + $0xd8] sm:$0xff]
      %v847 = vld [vmem:[%s394 + $0xe0] sm:$0xff]
      %v848 = vld [vmem:[%s394 + $0xe8] sm:$0xff]
      %v849 = vld [vmem:[%s394 + $0xf0] sm:$0xff]
      %v850 = vld [vmem:[%s394 + $0xf8] sm:$0xff]
      %v851 = vld [vmem:[%s399] sm:$0x3]
      %v853 = vperm.slane %v851, 0
      %v854 = vperm.slane %v851, 1
      %v858 = vunpack.c.l.b16 %v818
      %v859 = vunpack.c.h.b16 %v818
      %v860 = vpack.c.b16 %v858, %v858
      %v861 = vpack.c.b16 %v859, %v859
      %v896 = vunpack.c.l.b16 %v819
      %v897 = vunpack.c.h.b16 %v819
      %v898 = vunpack.c.l.b16 %v820
      %v899 = vunpack.c.h.b16 %v820
      %v900 = vunpack.c.l.b16 %v821
      %v901 = vunpack.c.h.b16 %v821
      %v902 = vunpack.c.l.b16 %v822
      %v903 = vunpack.c.h.b16 %v822
      %v904 = vunpack.c.l.b16 %v823
      %v905 = vunpack.c.h.b16 %v823
      %v906 = vunpack.c.l.b16 %v824
      %v907 = vunpack.c.h.b16 %v824
      %v908 = vunpack.c.l.b16 %v825
      %v909 = vunpack.c.h.b16 %v825
      %v910 = vunpack.c.l.b16 %v826
      %v911 = vunpack.c.h.b16 %v826
      %v912 = vunpack.c.l.b16 %v827
      %v913 = vunpack.c.h.b16 %v827
      %v914 = vunpack.c.l.b16 %v828
      %v915 = vunpack.c.h.b16 %v828
      %v916 = vunpack.c.l.b16 %v829
      %v917 = vunpack.c.h.b16 %v829
      %v918 = vunpack.c.l.b16 %v830
      %v919 = vunpack.c.h.b16 %v830
      %v920 = vunpack.c.l.b16 %v831
      %v921 = vunpack.c.h.b16 %v831
      %v922 = vunpack.c.l.b16 %v832
      %v923 = vunpack.c.h.b16 %v832
      %v924 = vunpack.c.l.b16 %v833
      %v925 = vunpack.c.h.b16 %v833
      %v926 = vunpack.c.l.b16 %v834
      %v927 = vunpack.c.h.b16 %v834
      %v928 = vunpack.c.l.b16 %v835
      %v929 = vunpack.c.h.b16 %v835
      %v930 = vunpack.c.l.b16 %v836
      %v931 = vunpack.c.h.b16 %v836
      %v932 = vunpack.c.l.b16 %v837
      %v933 = vunpack.c.h.b16 %v837
      %v934 = vunpack.c.l.b16 %v838
      %v935 = vunpack.c.h.b16 %v838
      %v936 = vunpack.c.l.b16 %v839
      %v937 = vunpack.c.h.b16 %v839
      %v938 = vunpack.c.l.b16 %v840
      %v939 = vunpack.c.h.b16 %v840
      %v940 = vunpack.c.l.b16 %v841
      %v941 = vunpack.c.h.b16 %v841
      %v942 = vunpack.c.l.b16 %v842
      %v943 = vunpack.c.h.b16 %v842
      %v944 = vunpack.c.l.b16 %v843
      %v945 = vunpack.c.h.b16 %v843
      %v946 = vunpack.c.l.b16 %v844
      %v947 = vunpack.c.h.b16 %v844
      %v948 = vunpack.c.l.b16 %v845
      %v949 = vunpack.c.h.b16 %v845
      %v950 = vunpack.c.l.b16 %v846
      %v951 = vunpack.c.h.b16 %v846
      %v952 = vunpack.c.l.b16 %v847
      %v953 = vunpack.c.h.b16 %v847
      %v954 = vunpack.c.l.b16 %v848
      %v955 = vunpack.c.h.b16 %v848
      %v956 = vunpack.c.l.b16 %v849
      %v957 = vunpack.c.h.b16 %v849
      %v958 = vunpack.c.l.b16 %v850
      %v959 = vunpack.c.h.b16 %v850
      %v960 = vpack.c.b16 %v898, %v896
      %v961 = vpack.c.b16 %v899, %v897
      %v962 = vpack.c.b16 %v902, %v900
      %v963 = vpack.c.b16 %v903, %v901
      %v964 = vpack.c.b16 %v906, %v904
      %v965 = vpack.c.b16 %v907, %v905
      %v966 = vpack.c.b16 %v910, %v908
      %v967 = vpack.c.b16 %v911, %v909
      %v968 = vpack.c.b16 %v914, %v912
      %v969 = vpack.c.b16 %v915, %v913
      %v970 = vpack.c.b16 %v918, %v916
      %v971 = vpack.c.b16 %v919, %v917
      %v972 = vpack.c.b16 %v922, %v920
      %v973 = vpack.c.b16 %v923, %v921
      %v974 = vpack.c.b16 %v926, %v924
      %v975 = vpack.c.b16 %v927, %v925
      %v976 = vpack.c.b16 %v930, %v928
      %v977 = vpack.c.b16 %v931, %v929
      %v978 = vpack.c.b16 %v934, %v932
      %v979 = vpack.c.b16 %v935, %v933
      %v980 = vpack.c.b16 %v938, %v936
      %v981 = vpack.c.b16 %v939, %v937
      %v982 = vpack.c.b16 %v942, %v940
      %v983 = vpack.c.b16 %v943, %v941
      %v984 = vpack.c.b16 %v946, %v944
      %v985 = vpack.c.b16 %v947, %v945
      %v986 = vpack.c.b16 %v950, %v948
      %v987 = vpack.c.b16 %v951, %v949
      %v988 = vpack.c.b16 %v954, %v952
      %v989 = vpack.c.b16 %v955, %v953
      %v990 = vpack.c.b16 %v958, %v956
      %v991 = vpack.c.b16 %v959, %v957
      %1024 = vmatpush.bf16.msra.mxu0 %v974
      %1025 = vmatpush.bf16.msra.mxu0 %v972
      %1026 = vmatpush.bf16.msra.mxu0 %v970
      %1027 = vmatpush.bf16.msra.mxu0 %v968
      %1028 = vmatpush.bf16.msra.mxu0 %v966
      %1029 = vmatpush.bf16.msra.mxu0 %v964
      %1030 = vmatpush.bf16.msra.mxu0 %v962
      %1031 = vmatpush.bf16.msra.mxu0 %v960
      %1032 = vmatmul.bf16.gmra.mxu0 %v860
      %v1033 = vpop.f32.mrf.mxu0
      %v1034 = vadd.f32 %v853, %v1033
      %v1035 = vpop.f32.mrf.mxu0
      %1036 = vdwg.mxu0
      %1037 = vmatpush.bf16.msra.mxu0 %v990
      %1038 = vmatpush.bf16.msra.mxu0 %v988
      %1039 = vmatpush.bf16.msra.mxu0 %v986
      %1040 = vmatpush.bf16.msra.mxu0 %v984
      %1041 = vmatpush.bf16.msra.mxu0 %v982
      %1042 = vmatpush.bf16.msra.mxu0 %v980
      %1043 = vmatpush.bf16.msra.mxu0 %v978
      %1044 = vmatpush.bf16.msra.mxu0 %v976
      %1045 = vmatmul.bf16.gmra.mxu0 %v861
      %v1046 = vpop.f32.mrf.mxu0
      %v1047 = vadd.f32 %v1034, %v1046
      %v1048 = vpop.f32.mrf.mxu0
      %1049 = vdwg.mxu0
      %1050 = vmatpush.bf16.msra.mxu0 %v975
      %1051 = vmatpush.bf16.msra.mxu0 %v973
      %1052 = vmatpush.bf16.msra.mxu0 %v971
      %1053 = vmatpush.bf16.msra.mxu0 %v969
      %1054 = vmatpush.bf16.msra.mxu0 %v967
      %1055 = vmatpush.bf16.msra.mxu0 %v965
      %1056 = vmatpush.bf16.msra.mxu0 %v963
      %1057 = vmatpush.bf16.msra.mxu0 %v961
      %1058 = vmatmul.bf16.gmra.mxu0 %v860
      %v1059 = vpop.f32.mrf.mxu0
      %v1060 = vadd.f32 %v854, %v1059
      %v1061 = vpop.f32.mrf.mxu0
      %1062 = vdwg.mxu0
      %1063 = vmatpush.bf16.msra.mxu0 %v991
      %1064 = vmatpush.bf16.msra.mxu0 %v989
      %1065 = vmatpush.bf16.msra.mxu0 %v987
      %1066 = vmatpush.bf16.msra.mxu0 %v985
      %1067 = vmatpush.bf16.msra.mxu0 %v983
      %1068 = vmatpush.bf16.msra.mxu0 %v981
      %1069 = vmatpush.bf16.msra.mxu0 %v979
      %1070 = vmatpush.bf16.msra.mxu0 %v977
      %1071 = vmatmul.bf16.gmra.mxu0 %v861
      %v1072 = vpop.f32.mrf.mxu0
      %v1073 = vadd.f32 %v1060, %v1072
      %v1074 = vpop.f32.mrf.mxu0
      %1075 = vdwg.mxu0
      %v1076 = vtanh.pop %v1047
      %v1077 = vtanh.pop %v1073
      %1078 = vst [vmem:[%s409] sm:$0xff] %v1076
      %1079 = vst [vmem:[%s409 + $0x8] sm:$0xff] %v1077
      %s1080 = smul.u32 2, %s25
      %p1081 = scmp.lt.s32.totalorder %s24, 1
      %s1082 = scalar_select %p1081, %s24, 1
      %p1083 = scmp.lt.s32.totalorder %s1080, 1
      %s1084 = scalar_select %p1083, %s1080, 1
      %s1085 = smul.addr %s1082, 2
      %s1086 = sadd.s32 %s1084, %s1085
      %s1087 = smul.addr %s1086, 8
      %s1088 = scalar_lea.vmem %s9, %s1087
      // Predicated region
      $region61: #{conditional_g_forward.1} parent=55 // pred_check
        %p1089 = pneg %p261
      $region62: #{conditional_g_forward.1} parent=55 // pred_check_branch
        %1091 = sbr.rel (%p1089) target = $region64
      $region63: #{conditional_g_forward.1} parent=55 // pred_region
        %s1092 = smul.u32 2, %s25
      $region64: #{conditional_g_forward.1} parent=55 // pred_fallthru
        _
    $region56: #{conditional_g_forward.1} parent=5 // pred_fallthru
      _
    %p1093 = scmp.le.s32.totalorder 2, %s15
    // Predicated region
    $region65: #{conditional_g_forward.1} parent=5 // pred_check
      %p1094 = pneg %p1093
    $region66: #{conditional_g_forward.1} parent=5 // pred_check_branch
      %1096 = sbr.rel (%p1094) target = $region68
    $region67: #{conditional_g_forward.1} parent=5 // pred_region
      %s1097 = ssub.s32 %s15, 2
      // Predicated region
      $region69: #{conditional_g_forward.1} parent=67 // pred_check
        %p1098 = pneg %p267
      $region70: #{conditional_g_forward.1} parent=67 // pred_check_branch
        %1100 = sbr.rel (%p1098) target = $region72
      $region71: #{conditional_g_forward.1} parent=67 // pred_region
        %s1101 = smul.u32 2, %s27
        %p1102 = scmp.lt.s32.totalorder %s26, 1
        %s1103 = scalar_select %p1102, %s26, 1
        %p1104 = scmp.lt.s32.totalorder %s1101, 1
        %s1105 = scalar_select %p1104, %s1101, 1
        %s1106 = smul.addr %s1103, 2
        %s1107 = sadd.s32 %s1105, %s1106
        %s1108 = smul.addr %s1107, 8
        %s1109 = scalar_lea.vmem %s9, %s1108
      $region72: #{conditional_g_forward.1} parent=67 // pred_fallthru
        _
    $region68: #{conditional_g_forward.1} parent=5 // pred_fallthru
      _
  $region6: #{conditional_g_forward.1} parent=0 // loop_footer
    %s19 = sadd.s32 1, %s15
  $region7: #{conditional_g_forward.1} parent=0 // loop_footer_branch
    %14 = sbr.rel target = $region3
  $region8: #{conditional_g_forward.1} parent=0 // loop_exit
    _

</llo_original>
